<compile_context>
chip_gen: v5e
topology: v5e:2x2
jax: 0.10.0
libtpu: 0.0.40
codegen_flags: <defaults>
</compile_context>

<pallas_src>
import jax
import jax.numpy as jnp
from jax.experimental import pallas as pl
from jax.experimental.pallas import tpu as pltpu


def _h_sigmoid_kernel(x_ref, o_ref):
    x = x_ref[...]
    # relu6(x + 3) / 6  ==  clamp(x + 3, 0, 6) / 6
    o_ref[...] = (jnp.clip(x + 3.0, 0.0, 6.0) / 6.0).astype(o_ref.dtype)


def _h_sigmoid_xla(x):
    # Plain elementwise fallback (ragged sizes / zero-size): one read + one
    # write, which is already optimal for a bandwidth-bound op.
    return jnp.clip(x + 3.0, 0.0, 6.0) / 6.0


def _tpu_generation() -> str:
    try:
        kind = jax.devices()[0].device_kind.lower()
    except Exception:
        return "unknown"
    if "v7" in kind:
        return "v7"
    if "v6" in kind or "trillium" in kind:
        return "v6"
    if "v5e" in kind or "v5 lite" in kind or "v5lite" in kind:
        return "v5e"
    return "unknown"


def _block_bytes_and_vmem_limit(gen: str):
    # (target block bytes, vmem_limit_bytes or None)
    if gen == "v7":
        # ~3.2 TB/s HBM: 2 MiB steps expose the ~0.35 us per-step overhead.
        # 4 double-buffered 8 MiB buffers = 32 MiB -> raise scoped VMEM
        # (v7x physical VMEM is 64 MiB, so 48 MiB leaves headroom).
        return 8 * 1024 * 1024, 48 << 20
    if gen == "v6":
        # 4x4 MiB = 16 MiB, comfortably under the 32 MiB scoped default.
        return 4 * 1024 * 1024, None
    # v5e (16 MiB scoped default) and unknown chips: stay at 2 MiB blocks.
    return 2 * 1024 * 1024, None


def h_sigmoid(x: jax.Array, inplace: bool = False) -> jax.Array:
    """Elementwise hard-sigmoid, matching F.relu6(x + 3.0) / 6.0.

    Set inplace=True only when the caller donates `x` (adds
    input_output_aliases={0: 0} so no second full-size HBM buffer is needed).
    """
    orig_shape = x.shape
    dtype = x.dtype
    n = x.size
    if n == 0:
        return x

    # Widest lane dim that divides the flat length -> fewer, fatter DMAs.
    lane = None
    for cand in (1024, 512, 256, 128):
        if n % cand == 0:
            lane = cand
            break
    if lane is None:
        # Ragged size: padding + slicing would add a full extra HBM round
        # trip on this bandwidth-bound op, so just use XLA directly.
        return _h_sigmoid_xla(x)

    itemsize = jnp.dtype(dtype).itemsize
    # Sublane packing: 8 rows/vreg for 32-bit, 16 for bf16/f16, 32 for 8-bit.
    sub_mult = max(8, 32 // max(itemsize, 1))

    x2d = jnp.reshape(x, (n // lane, lane))
    rows = x2d.shape[0]

    gen = _tpu_generation()
    target_bytes, vmem_limit = _block_bytes_and_vmem_limit(gen)

    # Target rows per block from the byte budget (multiple of the sublane tile).
    tile_rows_t = (target_bytes // (lane * itemsize)) // sub_mult * sub_mult
    tile_rows_t = max(sub_mult, tile_rows_t)

    # Pick an even block count >= 2 whenever the tensor is big enough, so the
    # "parallel" grid axis can be split evenly across v7x's two TensorCores.
    if rows <= tile_rows_t:
        nblk = 2 if rows >= 2 * sub_mult else 1
    else:
        nblk = pl.cdiv(rows, tile_rows_t)
        if nblk % 2:
            nblk += 1

    if nblk == 1:
        tile_rows = rows  # single block == full array dims (always legal)
    else:
        tile_rows = -(-pl.cdiv(rows, nblk) // sub_mult) * sub_mult

    grid = (pl.cdiv(rows, tile_rows),)

    flops = 3 * n  # add + clamp + divide (advisory only)
    cost = pl.CostEstimate(
        flops=flops, transcendentals=0, bytes_accessed=2 * n * itemsize
    )

    call_kwargs = {}
    if inplace:
        call_kwargs["input_output_aliases"] = {0: 0}

    out2d = pl.pallas_call(
        _h_sigmoid_kernel,
        out_shape=jax.ShapeDtypeStruct((rows, lane), dtype),
        grid_spec=pltpu.PrefetchScalarGridSpec(
            num_scalar_prefetch=0,
            grid=grid,
            in_specs=[pl.BlockSpec((tile_rows, lane), lambda i: (i, 0))],
            out_specs=pl.BlockSpec((tile_rows, lane), lambda i: (i, 0)),
        ),
        compiler_params=pltpu.CompilerParams(
            dimension_semantics=("parallel",),
            vmem_limit_bytes=vmem_limit,
        ),
        cost_estimate=cost,
        **call_kwargs,
    )(x2d)

    return jnp.reshape(out2d, orig_shape)


if __name__ == "__main__":
    key = jax.random.PRNGKey(0)

    # NCHW input, consistent with how h_sigmoid is used inside conv attention blocks.
    x = jax.random.normal(key, (2, 4, 16, 16), dtype=jnp.float32) * 4.0
    out = jax.block_until_ready(h_sigmoid(x))
    ref = jnp.clip(x + 3.0, 0.0, 6.0) / 6.0
    assert out.shape == x.shape and out.dtype == x.dtype
    assert jnp.max(jnp.abs(out - ref)) < 1e-6

    # Larger aligned input: exercises the multi-block (even grid) path.
    x1 = jax.random.normal(jax.random.PRNGKey(2), (4, 8, 32, 32), dtype=jnp.float32) * 4.0
    out1 = jax.block_until_ready(h_sigmoid(x1))
    ref1 = jnp.clip(x1 + 3.0, 0.0, 6.0) / 6.0
    assert out1.shape == x1.shape and out1.dtype == x1.dtype
    assert jnp.max(jnp.abs(out1 - ref1)) < 1e-6

    # Ragged size: goes through the plain-XLA fallback (no pad+slice round trip).
    x2 = jax.random.normal(jax.random.PRNGKey(1), (3, 5, 7, 9), dtype=jnp.float32) * 4.0
    out2 = jax.block_until_ready(h_sigmoid(x2))
    ref2 = jnp.clip(x2 + 3.0, 0.0, 6.0) / 6.0
    assert out2.shape == x2.shape and out2.dtype == x2.dtype
    assert jnp.max(jnp.abs(out2 - ref2)) < 1e-6

    print("KERNEL_OK")
</pallas_src>

<mosaic_0001>
module attributes {stable_mosaic.version = 11 : i64} {
  func.func @_h_sigmoid_kernel(%arg0: i32, %arg1: memref<2x1024xf32, #tpu.memory_space<vmem>>, %arg2: memref<2x1024xf32, #tpu.memory_space<vmem>>) attributes {dimension_semantics = [#tpu.dimension_semantics<parallel>], iteration_bounds = array<i64: 1>, scalar_prefetch = 0 : i64, scratch_operands = 0 : i64, tpu.core_type = #tpu.core_type<tc>, window_params = [{transform_indices = @transform_0, window_bounds = array<i64: 2, 1024>}, {transform_indices = @transform_1, window_bounds = array<i64: 2, 1024>}]} {
    %c0 = arith.constant 0 : index
    %c0_0 = arith.constant 0 : index
    %0 = vector.load %arg1[%c0, %c0_0] : memref<2x1024xf32, #tpu.memory_space<vmem>>, vector<2x1024xf32>
    %cst = arith.constant 3.000000e+00 : f32
    %1 = vector.broadcast %cst : f32 to vector<2x1024xf32>
    %2 = arith.addf %0, %1 : vector<2x1024xf32>
    %cst_1 = arith.constant 0.000000e+00 : f32
    %cst_2 = arith.constant 6.000000e+00 : f32
    %3 = vector.broadcast %cst_1 : f32 to vector<2x1024xf32>
    %4 = arith.maximumf %3, %2 : vector<2x1024xf32>
    %5 = vector.broadcast %cst_2 : f32 to vector<2x1024xf32>
    %6 = arith.minimumf %5, %4 : vector<2x1024xf32>
    %cst_3 = arith.constant 6.000000e+00 : f32
    %7 = vector.broadcast %cst_3 : f32 to vector<2x1024xf32>
    %8 = arith.divf %6, %7 : vector<2x1024xf32>
    %c0_4 = arith.constant 0 : index
    %c0_5 = arith.constant 0 : index
    %9 = vector.load %arg2[%c0_4, %c0_5] : memref<2x1024xf32, #tpu.memory_space<vmem>>, vector<2x1024xf32>
    tpu.vector_store %arg2[%c0_4, %c0_5], %8 {strides = array<i32>} : memref<2x1024xf32, #tpu.memory_space<vmem>>, vector<2x1024xf32>,
    return
  }
  func.func @transform_0(%arg0: i32) -> (i32, i32) {
    %c0_i32 = arith.constant 0 : i32
    %c0_i32_0 = arith.constant 0 : i32
    return %arg0, %c0_i32 : i32, i32
  }
  func.func @transform_1(%arg0: i32) -> (i32, i32) {
    %c0_i32 = arith.constant 0 : i32
    %c0_i32_0 = arith.constant 0 : i32
    return %arg0, %c0_i32 : i32, i32
  }
}

</mosaic_0001>

<llo_original>
// kernel: tpu_custom_call.1
$region0: #{tpu_custom_call.1}
  #allocation0 [shape = 'u32[]', space=smem, size = 0x4, offset = 0x4, fixed_abs, tag = 'smem constant byte address 0x4 - core index']
  #allocation1 [shape = 'u32[72,128]{1,0:T(1,128)}', space=vmem, size = 0x9000, scoped, tag = 'internal scratch']
  %s0 = inlined_call_operand.hbm [shape: f32[2,1024], index: 0, kind: input, shape index: {}]
  %s1 = inlined_call_operand.hbm [shape: f32[2,1024], index: 1, kind: output, shape index: {}]
  %s2 = sld [smem:[#allocation0]]
  $region18: #{tpu_custom_call.1} parent=0
    _
  %s4 = ssub.s32 1, %s2
  %s5 = scalar_select 0, %s4, %s2
  $region1: #{tpu_custom_call.1} parent=0
    #allocation2 [shape = 'u8[8192]{0}', space=vmem, size = 0x2000, scoped, tag = 'input window, operand 0, single buffered']
    #allocation3 [shape = 's32[1]{0}', space=sflag, size = 0x4, scoped, tag = 'scoped memory for tpu_custom_call.1']
    #allocation4 [shape = 's32[1]{0}', space=sflag, size = 0x4, scoped, tag = 'scoped memory for tpu_custom_call.1']
    #allocation5 [shape = 'u8[8192]{0}', space=vmem, size = 0x2000, scoped, tag = 'output window, operand 0, single buffered']
    %6 = vsyncpa [#allocation3], 0
    %7 = vsyncpa [#allocation4], 0
    // Predicated region
    $region2: #{tpu_custom_call.1} parent=1 // pred_check
      _
    $region3: #{tpu_custom_call.1} parent=1 // pred_check_branch
      %9 = sbr.rel (0) target = $region5
    $region4: #{tpu_custom_call.1} parent=1 // pred_region
      %11 = vsyncadd [#allocation3], 0
      %s13 = sshll.u32 %s0, 4
      %s14 = int_to_ptr.hbm [resolvable:$true] %s13
      %s15 = sshll.u32 [#allocation2], 4
      %s16 = int_to_ptr.vmem [resolvable:$true] %s15
      %18 = dma.hbm_to_vmem [thread:$0]  %s14, 256, %s16, [#allocation3]
    $region5: #{tpu_custom_call.1} parent=1 // pred_fallthru
      _
    // Predicated region
    $region6: #{tpu_custom_call.1} parent=1 // pred_check
      _
    $region7: #{tpu_custom_call.1} parent=1 // pred_check_branch
      %20 = sbr.rel (0) target = $region9
    $region8: #{tpu_custom_call.1} parent=1 // pred_region
      %22 = dma.done [#allocation3], 256
    $region9: #{tpu_custom_call.1} parent=1 // pred_fallthru
      _
    %v23 = vld [vmem:[#allocation2] sm:$0xff]
    %v24 = vld [vmem:[#allocation2 + $0x8] sm:$0xff]
    %v25 = vadd.f32 %v23, 3.0
    %v26 = vadd.f32 %v24, 3.0
    %v27 = vmax.f32 %v25, 0.0
    %v28 = vmax.f32 %v26, 0.0
    %v29 = vmin.f32 %v27, 6.0
    %v30 = vmin.f32 %v28, 6.0
    %v31 = vrcp.pop 6.0
    %v32 = vmul.f32 6.0, %v31
    %v33 = vsub.f32 1.0, %v32
    %v34 = vmul.f32 %v31, %v33
    %v35 = vadd.f32 %v31, %v34
    %vm36 = vweird.f32 %v31
    %v37 = vsel %vm36, %v31, %v35
    %v38 = vmul.f32 %v29, %v37
    %v39 = vmul.f32 %v30, %v37
    %40 = vst [vmem:[#allocation5] sm:$0xff] %v38
    %41 = vst [vmem:[#allocation5 + $0x8] sm:$0xff] %v39
    // Predicated region
    $region10: #{tpu_custom_call.1} parent=1 // pred_check
      _
    $region11: #{tpu_custom_call.1} parent=1 // pred_check_branch
      %43 = sbr.rel (0) target = $region13
    $region12: #{tpu_custom_call.1} parent=1 // pred_region
      %45 = vsyncadd [#allocation4], 0
      %s47 = sshll.u32 [#allocation5], 4
      %s48 = int_to_ptr.vmem [resolvable:$true] %s47
      %s49 = sshll.u32 %s1, 4
      %s50 = int_to_ptr.hbm [resolvable:$true] %s49
      %52 = dma.vmem_to_hbm [thread:$0]  %s48, 256, %s50, [#allocation4]
    $region13: #{tpu_custom_call.1} parent=1 // pred_fallthru
      _
    // Predicated region
    $region14: #{tpu_custom_call.1} parent=1 // pred_check
      _
    $region15: #{tpu_custom_call.1} parent=1 // pred_check_branch
      %54 = sbr.rel (0) target = $region17
    $region16: #{tpu_custom_call.1} parent=1 // pred_region
      %56 = dma.done [#allocation4], 256
    $region17: #{tpu_custom_call.1} parent=1 // pred_fallthru
      _
    %57 = vsyncpa [#allocation3], 1
    %58 = vsyncpa [#allocation4], 1

</llo_original>
